<compile_context>
chip_gen: v5e
topology: v5e:2x2
jax: 0.10.0
libtpu: 0.0.40
codegen_flags: <defaults>
</compile_context>

<pallas_src>
import jax
import jax.numpy as jnp
from jax.experimental import pallas as pl
from jax.experimental.pallas import tpu as pltpu


def lstm_seq_kernel(xs_ref, h0_ref, c0_ref, wi_ref, wh_ref, b_ref,
                    h_seq_ref, c_seq_ref,
                    xw_s, h_s, c_s):
    t = pl.program_id(0)
    H = h_s.shape[-1]

    @pl.when(t == 0)
    def _init():
        # Load initial states into the VMEM carry.
        h_s[...] = h0_ref[...]
        c_s[...] = c0_ref[...]
        # Whole-sequence input projection: one MXU GEMM with M = T
        # (instead of T separate M=1 matmuls).
        xw_s[...] = (jnp.dot(xs_ref[...].astype(jnp.bfloat16), wi_ref[...],
                             preferred_element_type=jnp.float32)
                     + b_ref[...])

    # Recurrent part: a single MXU push/drain per step (h_{t-1} @ Wh_all).
    gates = xw_s[pl.ds(t, 1), :] + jnp.dot(
        h_s[...].astype(jnp.bfloat16), wh_ref[...],
        preferred_element_type=jnp.float32)                    # (1, 4H) f32

    # Gate order [f, i, o, c]: sigmoid over one contiguous 3H slab, tanh over
    # the trailing H slab.  With H = 128 every slice is vreg(lane)-aligned.
    sg = jax.nn.sigmoid(gates[:, 0:3 * H])
    f_t = sg[:, 0 * H:1 * H]              # forget gate
    i_t = sg[:, 1 * H:2 * H]              # input gate
    o_t = sg[:, 2 * H:3 * H]              # output gate
    c_bar = jnp.tanh(gates[:, 3 * H:4 * H])  # candidate cell

    c_new = f_t * c_s[...] + i_t * c_bar
    h_new = o_t * jnp.tanh(c_new)

    # Carry for the next step.
    h_s[...] = h_new
    c_s[...] = c_new
    # Per-step states into the resident, lane-dense (T, H) output slabs.
    h_seq_ref[pl.ds(t, 1), :] = h_new
    c_seq_ref[pl.ds(t, 1), :] = c_new


def lstm_sequence(xs, h0, c0, params):
    """Run T LSTM steps in one pallas_call.

    xs: (T, I) f32, h0/c0: (1, H) f32. Returns (h_seq, c_seq), each (T, H) f32.
    """
    wi_all, wh_all, b_all = params
    T, I = xs.shape
    H = h0.shape[-1]

    def const(shape):  # whole-array block, resident across the grid
        return pl.BlockSpec(shape, lambda t: (0,) * len(shape))

    h_seq, c_seq = pl.pallas_call(
        lstm_seq_kernel,
        out_shape=(jax.ShapeDtypeStruct((T, H), jnp.float32),
                   jax.ShapeDtypeStruct((T, H), jnp.float32)),
        grid=(T,),
        in_specs=[const((T, I)),        # xs (whole sequence, loaded once)
                  const((1, H)),        # h0
                  const((1, H)),        # c0
                  const((I, 4 * H)),    # Wi_all (bf16, resident)
                  const((H, 4 * H)),    # Wh_all (bf16, resident)
                  const((1, 4 * H))],   # b_all (f32)
        out_specs=(const((T, H)), const((T, H))),
        scratch_shapes=[pltpu.VMEM((T, 4 * H), jnp.float32),   # x@Wi + b, all steps
                        pltpu.VMEM((1, H), jnp.float32),       # h carry
                        pltpu.VMEM((1, H), jnp.float32)],      # c carry
        compiler_params=pltpu.CompilerParams(
            dimension_semantics=("arbitrary",),   # time steps are sequential
            vmem_limit_bytes=32 * 1024 * 1024),
    )(xs, h0, c0, wi_all, wh_all, b_all)
    return h_seq, c_seq
    # Note: for multi-sequence batching, rows would be stacked into the M
    # dimension (B, I)/(B, H) and an independent batch grid axis marked
    # "parallel" (shards across v7x's two TensorCores). At large H on v7x
    # (64 MiB VMEM), keep weights bf16 or tile the 4H axis.


def lstm_forward(x, hidden_tuple, params):
    """Mirrors LSTM.forward: one step, returns (Ht, Ct) each shaped (1, 1, H)."""
    h_prev, c_prev = hidden_tuple
    H = h_prev.reshape(-1).shape[0]
    xs = x.reshape(1, -1).astype(jnp.float32)
    h0 = h_prev.reshape(1, H).astype(jnp.float32)
    c0 = c_prev.reshape(1, H).astype(jnp.float32)
    h_seq, c_seq = lstm_sequence(xs, h0, c0, params)
    return h_seq.reshape(1, 1, H), c_seq.reshape(1, 1, H)


def lstm_forward_sequence(xs, hidden_tuple, params):
    """Apply the module's forward T times with one fused kernel launch."""
    h_prev, c_prev = hidden_tuple
    T = xs.shape[0]
    H = h_prev.reshape(-1).shape[0]
    xs2 = xs.reshape(T, -1).astype(jnp.float32)
    h_seq, c_seq = lstm_sequence(xs2,
                                 h_prev.reshape(1, H).astype(jnp.float32),
                                 c_prev.reshape(1, H).astype(jnp.float32),
                                 params)
    ht = h_seq[-1].reshape(1, 1, H)   # mirrors Ht.view(1, 1, -1)
    ct = c_seq[-1].reshape(1, 1, H)   # mirrors Ct.view(1, 1, -1)
    return h_seq, c_seq, (ht, ct)


def init_params(key, input_size, hidden_size):
    """Synthetic weights for the 8 nn.Linear layers, packed for the kernel.

    PyTorch stores Linear weights as (out, in); we build them transposed
    (in, out), concatenate in gate order [f, i, o, c], and pre-sum the two
    biases per gate. Weights are cast to bf16 for the MXU; bias stays f32.
    """
    ks = jax.random.split(key, 16)
    scale_i = 1.0 / jnp.sqrt(input_size)
    scale_h = 1.0 / jnp.sqrt(hidden_size)

    def lin_w_in(k):
        return jax.random.uniform(k, (input_size, hidden_size),
                                  jnp.float32, -scale_i, scale_i)

    def lin_w_hid(k):
        return jax.random.uniform(k, (hidden_size, hidden_size),
                                  jnp.float32, -scale_h, scale_h)

    def lin_b(k, scale):
        return jax.random.uniform(k, (hidden_size,), jnp.float32, -scale, scale)

    # gate order: f, i, o, c  (sigmoid gates contiguous, tanh gate last)
    wi_all = jnp.concatenate(
        [lin_w_in(ks[0]), lin_w_in(ks[1]), lin_w_in(ks[2]), lin_w_in(ks[3])],
        axis=1)                                           # (I, 4H)
    wh_all = jnp.concatenate(
        [lin_w_hid(ks[4]), lin_w_hid(ks[5]), lin_w_hid(ks[6]), lin_w_hid(ks[7])],
        axis=1)                                           # (H, 4H)
    b_all = jnp.concatenate(
        [lin_b(ks[8], scale_i) + lin_b(ks[12], scale_h),
         lin_b(ks[9], scale_i) + lin_b(ks[13], scale_h),
         lin_b(ks[10], scale_i) + lin_b(ks[14], scale_h),
         lin_b(ks[11], scale_i) + lin_b(ks[15], scale_h)],
        axis=0).reshape(1, 4 * hidden_size)               # (1, 4H) f32
    return wi_all.astype(jnp.bfloat16), wh_all.astype(jnp.bfloat16), b_all


def lstm_reference_sequence(xs, h0, c0, params):
    """Pure-JAX reference (same bf16-weight / f32-accumulate numerics)."""
    wi_all, wh_all, b_all = params
    H = h0.shape[-1]

    def step(carry, x):
        h, c = carry
        xw = jnp.dot(x.reshape(1, -1).astype(jnp.bfloat16), wi_all,
                     preferred_element_type=jnp.float32) + b_all
        hw = jnp.dot(h.astype(jnp.bfloat16), wh_all,
                     preferred_element_type=jnp.float32)
        gates = xw + hw
        f = jax.nn.sigmoid(gates[:, 0 * H:1 * H])
        i = jax.nn.sigmoid(gates[:, 1 * H:2 * H])
        o = jax.nn.sigmoid(gates[:, 2 * H:3 * H])
        cb = jnp.tanh(gates[:, 3 * H:4 * H])
        c_new = f * c + i * cb
        h_new = o * jnp.tanh(c_new)
        return (h_new, c_new), (h_new, c_new)

    _, (hs, cs) = jax.lax.scan(step, (h0, c0), xs)
    return hs[:, 0, :], cs[:, 0, :]


if __name__ == "__main__":
    input_size, hidden_size, seq_len = 64, 128, 8   # H = lane width -> dense stores

    key = jax.random.PRNGKey(0)
    k_params, k_x, k_h, k_c = jax.random.split(key, 4)
    params = init_params(k_params, input_size, hidden_size)

    # One-token-per-step embeddings plus (1, 1, H) states, as in seq2seq decode.
    xs = jax.random.normal(k_x, (seq_len, 1, input_size), jnp.float32)
    h0 = jax.random.normal(k_h, (1, 1, hidden_size), jnp.float32)
    c0 = jax.random.normal(k_c, (1, 1, hidden_size), jnp.float32)

    # Fused path: all seq_len LSTM steps in a single pallas_call.
    h_seq, c_seq, (ht, ct) = lstm_forward_sequence(xs, (h0, c0), params)
    jax.block_until_ready((h_seq, c_seq, ht, ct))

    h_ref, c_ref = lstm_reference_sequence(xs.reshape(seq_len, input_size),
                                           h0.reshape(1, hidden_size),
                                           c0.reshape(1, hidden_size), params)
    assert ht.shape == (1, 1, hidden_size) and ct.shape == (1, 1, hidden_size)
    assert jnp.allclose(h_seq, h_ref, atol=1e-3, rtol=1e-3)
    assert jnp.allclose(c_seq, c_ref, atol=1e-3, rtol=1e-3)

    # Single-step call mirroring LSTM.forward's exact interface.
    ht1, ct1 = lstm_forward(xs[0], (h0, c0), params)
    jax.block_until_ready((ht1, ct1))
    assert jnp.allclose(ht1.reshape(1, -1), h_ref[0:1], atol=1e-3, rtol=1e-3)
    assert jnp.allclose(ct1.reshape(1, -1), c_ref[0:1], atol=1e-3, rtol=1e-3)

    print("KERNEL_OK")
</pallas_src>

<mosaic_0001>
module attributes {stable_mosaic.version = 11 : i64} {
  func.func @lstm_seq_kernel(%arg0: i32, %arg1: memref<8x64xf32, #tpu.memory_space<vmem>>, %arg2: memref<1x128xf32, #tpu.memory_space<vmem>>, %arg3: memref<1x128xf32, #tpu.memory_space<vmem>>, %arg4: memref<64x512xbf16, #tpu.memory_space<vmem>>, %arg5: memref<128x512xbf16, #tpu.memory_space<vmem>>, %arg6: memref<1x512xf32, #tpu.memory_space<vmem>>, %arg7: memref<8x128xf32, #tpu.memory_space<vmem>>, %arg8: memref<8x128xf32, #tpu.memory_space<vmem>>, %arg9: memref<8x512xf32, #tpu.memory_space<vmem>>, %arg10: memref<1x128xf32, #tpu.memory_space<vmem>>, %arg11: memref<1x128xf32, #tpu.memory_space<vmem>>) attributes {dimension_semantics = [#tpu.dimension_semantics<arbitrary>], iteration_bounds = array<i64: 8>, scalar_prefetch = 0 : i64, scratch_operands = 3 : i64, tpu.core_type = #tpu.core_type<tc>, window_params = [{pipeline_mode = #tpu.pipeline_mode<synchronous>, transform_indices = @transform_0, window_bounds = array<i64: 8, 64>}, {pipeline_mode = #tpu.pipeline_mode<synchronous>, transform_indices = @transform_1, window_bounds = array<i64: 1, 128>}, {pipeline_mode = #tpu.pipeline_mode<synchronous>, transform_indices = @transform_2, window_bounds = array<i64: 1, 128>}, {pipeline_mode = #tpu.pipeline_mode<synchronous>, transform_indices = @transform_3, window_bounds = array<i64: 64, 512>}, {pipeline_mode = #tpu.pipeline_mode<synchronous>, transform_indices = @transform_4, window_bounds = array<i64: 128, 512>}, {pipeline_mode = #tpu.pipeline_mode<synchronous>, transform_indices = @transform_5, window_bounds = array<i64: 1, 512>}, {pipeline_mode = #tpu.pipeline_mode<synchronous>, transform_indices = @transform_6, window_bounds = array<i64: 8, 128>}, {pipeline_mode = #tpu.pipeline_mode<synchronous>, transform_indices = @transform_7, window_bounds = array<i64: 8, 128>}]} {
    %c0_i32 = arith.constant 0 : i32
    %0 = arith.cmpi eq, %arg0, %c0_i32 : i32
    %1 = arith.extui %0 : i1 to i32
    %c0_i32_0 = arith.constant 0 : i32
    %2 = arith.cmpi ne, %1, %c0_i32_0 : i32
    scf.if %2 {
      %c0_14 = arith.constant 0 : index
      %c0_15 = arith.constant 0 : index
      %33 = vector.load %arg2[%c0_14, %c0_15] : memref<1x128xf32, #tpu.memory_space<vmem>>, vector<1x128xf32>
      %c0_16 = arith.constant 0 : index
      %c0_17 = arith.constant 0 : index
      %34 = vector.load %arg10[%c0_16, %c0_17] : memref<1x128xf32, #tpu.memory_space<vmem>>, vector<1x128xf32>
      tpu.vector_store %arg10[%c0_16, %c0_17], %33 {strides = array<i32>} : memref<1x128xf32, #tpu.memory_space<vmem>>, vector<1x128xf32>,
      %c0_18 = arith.constant 0 : index
      %c0_19 = arith.constant 0 : index
      %35 = vector.load %arg3[%c0_18, %c0_19] : memref<1x128xf32, #tpu.memory_space<vmem>>, vector<1x128xf32>
      %c0_20 = arith.constant 0 : index
      %c0_21 = arith.constant 0 : index
      %36 = vector.load %arg11[%c0_20, %c0_21] : memref<1x128xf32, #tpu.memory_space<vmem>>, vector<1x128xf32>
      tpu.vector_store %arg11[%c0_20, %c0_21], %35 {strides = array<i32>} : memref<1x128xf32, #tpu.memory_space<vmem>>, vector<1x128xf32>,
      %c0_22 = arith.constant 0 : index
      %c0_23 = arith.constant 0 : index
      %37 = vector.load %arg1[%c0_22, %c0_23] : memref<8x64xf32, #tpu.memory_space<vmem>>, vector<8x64xf32>
      %38 = arith.truncf %37 : vector<8x64xf32> to vector<8x64xbf16>
      %c0_24 = arith.constant 0 : index
      %c0_25 = arith.constant 0 : index
      %39 = vector.load %arg4[%c0_24, %c0_25] : memref<64x512xbf16, #tpu.memory_space<vmem>>, vector<64x512xbf16>
      %cst_26 = arith.constant dense<0.000000e+00> : vector<8x512xf32>
      %40 = tpu.matmul %38, %39, %cst_26 {dimension_numbers = #tpu.dot_dimension_numbers<[1], [0], [0], [1], [0, 0, 1, 1], [], []>} : vector<8x64xbf16>, vector<64x512xbf16>, vector<8x512xf32> -> vector<8x512xf32>
      %c0_27 = arith.constant 0 : index
      %c0_28 = arith.constant 0 : index
      %41 = vector.load %arg6[%c0_27, %c0_28] : memref<1x512xf32, #tpu.memory_space<vmem>>, vector<1x512xf32>
      %42 = vector.broadcast %41 : vector<1x512xf32> to vector<8x512xf32>
      %43 = arith.addf %40, %42 : vector<8x512xf32>
      %c0_29 = arith.constant 0 : index
      %c0_30 = arith.constant 0 : index
      %44 = vector.load %arg9[%c0_29, %c0_30] : memref<8x512xf32, #tpu.memory_space<vmem>>, vector<8x512xf32>
      tpu.vector_store %arg9[%c0_29, %c0_30], %43 {strides = array<i32>} : memref<8x512xf32, #tpu.memory_space<vmem>>, vector<8x512xf32>,
    } else {
    }
    %3 = arith.index_cast %arg0 : i32 to index
    %c0 = arith.constant 0 : index
    %4 = vector.load %arg9[%3, %c0] : memref<8x512xf32, #tpu.memory_space<vmem>>, vector<1x512xf32>
    %c0_1 = arith.constant 0 : index
    %c0_2 = arith.constant 0 : index
    %5 = vector.load %arg10[%c0_1, %c0_2] : memref<1x128xf32, #tpu.memory_space<vmem>>, vector<1x128xf32>
    %6 = arith.truncf %5 : vector<1x128xf32> to vector<1x128xbf16>
    %c0_3 = arith.constant 0 : index
    %c0_4 = arith.constant 0 : index
    %7 = vector.load %arg5[%c0_3, %c0_4] : memref<128x512xbf16, #tpu.memory_space<vmem>>, vector<128x512xbf16>
    %cst = arith.constant dense<0.000000e+00> : vector<1x512xf32>
    %8 = tpu.matmul %6, %7, %cst {dimension_numbers = #tpu.dot_dimension_numbers<[1], [0], [0], [1], [0, 0, 1, 1], [], []>} : vector<1x128xbf16>, vector<128x512xbf16>, vector<1x512xf32> -> vector<1x512xf32>
    %9 = arith.addf %4, %8 : vector<1x512xf32>
    %10 = vector.extract_strided_slice %9 {offsets = [0, 0], sizes = [1, 384], strides = [1, 1]} : vector<1x512xf32> to vector<1x384xf32>
    %11 = arith.negf %10 : vector<1x384xf32>
    %12 = math.exp %11 : vector<1x384xf32>
    %cst_5 = arith.constant 1.000000e+00 : f32
    %13 = vector.broadcast %cst_5 : f32 to vector<1x384xf32>
    %14 = arith.addf %13, %12 : vector<1x384xf32>
    %15 = arith.divf %13, %14 : vector<1x384xf32>
    %16 = vector.extract_strided_slice %15 {offsets = [0, 0], sizes = [1, 128], strides = [1, 1]} : vector<1x384xf32> to vector<1x128xf32>
    %17 = vector.extract_strided_slice %15 {offsets = [0, 128], sizes = [1, 128], strides = [1, 1]} : vector<1x384xf32> to vector<1x128xf32>
    %18 = vector.extract_strided_slice %15 {offsets = [0, 256], sizes = [1, 128], strides = [1, 1]} : vector<1x384xf32> to vector<1x128xf32>
    %19 = vector.extract_strided_slice %9 {offsets = [0, 384], sizes = [1, 128], strides = [1, 1]} : vector<1x512xf32> to vector<1x128xf32>
    %20 = math.tanh %19 : vector<1x128xf32>
    %c0_6 = arith.constant 0 : index
    %c0_7 = arith.constant 0 : index
    %21 = vector.load %arg11[%c0_6, %c0_7] : memref<1x128xf32, #tpu.memory_space<vmem>>, vector<1x128xf32>
    %22 = arith.mulf %16, %21 : vector<1x128xf32>
    %23 = arith.mulf %17, %20 : vector<1x128xf32>
    %24 = arith.addf %22, %23 : vector<1x128xf32>
    %25 = math.tanh %24 : vector<1x128xf32>
    %26 = arith.mulf %18, %25 : vector<1x128xf32>
    %c0_8 = arith.constant 0 : index
    %c0_9 = arith.constant 0 : index
    %27 = vector.load %arg10[%c0_8, %c0_9] : memref<1x128xf32, #tpu.memory_space<vmem>>, vector<1x128xf32>
    tpu.vector_store %arg10[%c0_8, %c0_9], %26 {strides = array<i32>} : memref<1x128xf32, #tpu.memory_space<vmem>>, vector<1x128xf32>,
    %c0_10 = arith.constant 0 : index
    %c0_11 = arith.constant 0 : index
    %28 = vector.load %arg11[%c0_10, %c0_11] : memref<1x128xf32, #tpu.memory_space<vmem>>, vector<1x128xf32>
    tpu.vector_store %arg11[%c0_10, %c0_11], %24 {strides = array<i32>} : memref<1x128xf32, #tpu.memory_space<vmem>>, vector<1x128xf32>,
    %29 = arith.index_cast %arg0 : i32 to index
    %c0_12 = arith.constant 0 : index
    %30 = vector.load %arg7[%29, %c0_12] : memref<8x128xf32, #tpu.memory_space<vmem>>, vector<1x128xf32>
    tpu.vector_store %arg7[%29, %c0_12], %26 {strides = array<i32>} : memref<8x128xf32, #tpu.memory_space<vmem>>, vector<1x128xf32>,
    %31 = arith.index_cast %arg0 : i32 to index
    %c0_13 = arith.constant 0 : index
    %32 = vector.load %arg8[%31, %c0_13] : memref<8x128xf32, #tpu.memory_space<vmem>>, vector<1x128xf32>
    tpu.vector_store %arg8[%31, %c0_13], %24 {strides = array<i32>} : memref<8x128xf32, #tpu.memory_space<vmem>>, vector<1x128xf32>,
    return
  }
  func.func @transform_0(%arg0: i32) -> (i32, i32) {
    %c0_i32 = arith.constant 0 : i32
    %c0_i32_0 = arith.constant 0 : i32
    %c0_i32_1 = arith.constant 0 : i32
    return %c0_i32, %c0_i32_0 : i32, i32
  }
  func.func @transform_1(%arg0: i32) -> (i32, i32) {
    %c0_i32 = arith.constant 0 : i32
    %c0_i32_0 = arith.constant 0 : i32
    %c0_i32_1 = arith.constant 0 : i32
    return %c0_i32, %c0_i32_0 : i32, i32
  }
  func.func @transform_2(%arg0: i32) -> (i32, i32) {
    %c0_i32 = arith.constant 0 : i32
    %c0_i32_0 = arith.constant 0 : i32
    %c0_i32_1 = arith.constant 0 : i32
    return %c0_i32, %c0_i32_0 : i32, i32
  }
  func.func @transform_3(%arg0: i32) -> (i32, i32) {
    %c0_i32 = arith.constant 0 : i32
    %c0_i32_0 = arith.constant 0 : i32
    %c0_i32_1 = arith.constant 0 : i32
    return %c0_i32, %c0_i32_0 : i32, i32
  }
  func.func @transform_4(%arg0: i32) -> (i32, i32) {
    %c0_i32 = arith.constant 0 : i32
    %c0_i32_0 = arith.constant 0 : i32
    %c0_i32_1 = arith.constant 0 : i32
    return %c0_i32, %c0_i32_0 : i32, i32
  }
  func.func @transform_5(%arg0: i32) -> (i32, i32) {
    %c0_i32 = arith.constant 0 : i32
    %c0_i32_0 = arith.constant 0 : i32
    %c0_i32_1 = arith.constant 0 : i32
    return %c0_i32, %c0_i32_0 : i32, i32
  }
  func.func @transform_6(%arg0: i32) -> (i32, i32) {
    %c0_i32 = arith.constant 0 : i32
    %c0_i32_0 = arith.constant 0 : i32
    %c0_i32_1 = arith.constant 0 : i32
    return %c0_i32, %c0_i32_0 : i32, i32
  }
  func.func @transform_7(%arg0: i32) -> (i32, i32) {
    %c0_i32 = arith.constant 0 : i32
    %c0_i32_0 = arith.constant 0 : i32
    %c0_i32_1 = arith.constant 0 : i32
    return %c0_i32, %c0_i32_0 : i32, i32
  }
}

</mosaic_0001>

<llo_original>
// kernel: tpu_custom_call.1
$region0: #{tpu_custom_call.1}
  #allocation0 [shape = 'u32[]', space=smem, size = 0x4, offset = 0x4, fixed_abs, tag = 'smem constant byte address 0x4 - core index']
  #allocation1 [shape = 'u32[72,128]{1,0:T(1,128)}', space=vmem, size = 0x9000, scoped, tag = 'internal scratch']
  #allocation2 [shape = 'f32[8,512]{1,0:T(8,128)}', space=vmem, size = 0x4000, scoped, tag = 'scratch operand']
  #allocation3 [shape = 'f32[1,128]{1,0:T(1,128)}', space=vmem, size = 0x200, scoped, tag = 'scratch operand']
  #allocation4 [shape = 'f32[1,128]{1,0:T(1,128)}', space=vmem, size = 0x200, scoped, tag = 'scratch operand']
  %s0 = inlined_call_operand.hbm [shape: f32[8,64], index: 0, kind: input, shape index: {}]
  %s1 = inlined_call_operand.hbm [shape: f32[1,128], index: 1, kind: input, shape index: {}]
  %s2 = inlined_call_operand.hbm [shape: f32[1,128], index: 2, kind: input, shape index: {}]
  %s3 = inlined_call_operand.hbm [shape: bf16[64,512], index: 3, kind: input, shape index: {}]
  %s4 = inlined_call_operand.hbm [shape: bf16[128,512], index: 4, kind: input, shape index: {}]
  %s5 = inlined_call_operand.vmem [shape: f32[1,512], index: 5, kind: input, shape index: {}]
  %s6 = inlined_call_operand.hbm [shape: f32[8,128], index: 6, kind: output, shape index: {0}]
  %s7 = inlined_call_operand.hbm [shape: f32[8,128], index: 7, kind: output, shape index: {1}]
  %8 = xla_tuple %s6, %s7
  %s9 = sld [smem:[#allocation0]]
  $region89: #{tpu_custom_call.1} parent=0
    _
  %s11 = ssub.s32 1, %s9
  %s12 = scalar_select 0, %s11, %s9
  $region1: #{tpu_custom_call.1} parent=0
    #allocation5 [shape = 'u8[4096]{0}', space=vmem, size = 0x1000, scoped, tag = 'input window, operand 0, single buffered']
    #allocation6 [shape = 's32[2]{0}', space=sflag, size = 0x8, scoped, tag = 'scoped memory for tpu_custom_call.1']
    #allocation7 [shape = 's32[2]{0}', space=sflag, size = 0x8, scoped, tag = 'scoped memory for tpu_custom_call.1']
    #allocation8 [shape = 'u8[512]{0}', space=vmem, size = 0x400, scoped, tag = 'input window, operand 1, single buffered']
    #allocation9 [shape = 's32[1]{0}', space=sflag, size = 0x4, scoped, tag = 'scoped memory for tpu_custom_call.1']
    #allocation10 [shape = 'u8[512]{0}', space=vmem, size = 0x400, scoped, tag = 'input window, operand 2, single buffered']
    #allocation11 [shape = 'u8[65536]{0}', space=vmem, size = 0x10000, scoped, tag = 'input window, operand 3, single buffered']
    #allocation12 [shape = 's32[1]{0}', space=sflag, size = 0x4, scoped, tag = 'scoped memory for tpu_custom_call.1']
    #allocation13 [shape = 'u8[131072]{0}', space=vmem, size = 0x20000, scoped, tag = 'input window, operand 4, single buffered']
    #allocation14 [shape = 'u8[4096]{0}', space=vmem, size = 0x1000, scoped, tag = 'output window, operand 0, single buffered']
    #allocation15 [shape = 'u8[4096]{0}', space=vmem, size = 0x1000, scoped, tag = 'output window, operand 1, single buffered']
    #allocation16 [shape = 's32[1]{0}', space=sflag, size = 0x4, scoped, tag = 'scoped memory for tpu_custom_call.1']
    %13 = vsyncpa [#allocation6], 0
    %14 = vsyncpa [#allocation9], 0
    %15 = vsyncpa [#allocation12], 0
    %16 = vsyncpa [#allocation7], 0
    %17 = vsyncpa [#allocation16], 0
    loop: start=0, step=1, limit=10
    $region2: #{tpu_custom_call.1} parent=1 // loop_pre_header
      _
    $region3: #{tpu_custom_call.1} parent=1 // loop_header
      %s19 = sphi 0, %s23
      %p20 = scmp.ge.s32.totalorder %s19, 10
      %s27 = sphi 0, %s27
      %s29 = sphi 0, %s27
      %s30 = sphi 0, %s29
      %s44 = sphi 0, %s30
      %s48 = sphi 0, %s48
      %s50 = sphi 0, %s48
      %s51 = sphi 0, %s50
      %s65 = sphi 0, %s51
      %s69 = sphi 0, %s69
      %s71 = sphi 0, %s69
      %s72 = sphi 0, %s71
      %s86 = sphi 0, %s72
      %s90 = sphi 0, %s90
      %s92 = sphi 0, %s90
      %s93 = sphi 0, %s92
      %s107 = sphi 0, %s93
      %s111 = sphi 0, %s111
      %s113 = sphi 0, %s111
      %s114 = sphi 0, %s113
      %s128 = sphi 0, %s114
      %s132 = sphi 0, %s132
      %s134 = sphi 0, %s132
      %s135 = sphi 0, %s134
      %s149 = sphi 0, %s135
      %s153 = sphi 0, %s153
      %s155 = sphi 0, %s153
      %s156 = sphi 0, %s155
      %s170 = sphi 0, %s156
      %s174 = sphi 0, %s174
      %s176 = sphi 0, %s174
      %s177 = sphi 0, %s176
      %s191 = sphi 0, %s177
    $region4: #{tpu_custom_call.1} parent=1 // loop_header_branch
      %22 = sbr.rel (%p20) target = $region8
    $region5: #{tpu_custom_call.1} parent=1 // loop_body
      %s24 = ssub.s32 %s19, 1
      %s25 = ssub.s32 %s19, 2
      %s26 = sadd.s32 %s19, 1
      %s28 = sadd.s32 %s27, 1
      %p31 = scmp.eq.s32.totalorder %s19, 7
      %p32 = scmp.ne.s32.totalorder %s27, %s29
      %p33 = scmp.eq.s32.totalorder %s19, 0
      %p34 = por %p32, %p33
      %p35 = scmp.ne.s32.totalorder %s27, %s29
      %p36 = scmp.eq.s32.totalorder %s24, 7
      %p37 = por %p35, %p36
      %p38 = scmp.ne.s32.totalorder %s29, %s30
      %p39 = scmp.eq.s32.totalorder %s24, 0
      %p40 = por %p38, %p39
      %p41 = scmp.ne.s32.totalorder %s29, %s30
      %p42 = scmp.eq.s32.totalorder %s25, 7
      %p43 = por %p41, %p42
      %p45 = scmp.ne.s32.totalorder %s30, %s44
      %p46 = scmp.eq.s32.totalorder %s25, 0
      %p47 = por %p45, %p46
      %s49 = sadd.s32 %s48, 1
      %p52 = scmp.eq.s32.totalorder %s19, 7
      %p53 = scmp.ne.s32.totalorder %s48, %s50
      %p54 = scmp.eq.s32.totalorder %s19, 0
      %p55 = por %p53, %p54
      %p56 = scmp.ne.s32.totalorder %s48, %s50
      %p57 = scmp.eq.s32.totalorder %s24, 7
      %p58 = por %p56, %p57
      %p59 = scmp.ne.s32.totalorder %s50, %s51
      %p60 = scmp.eq.s32.totalorder %s24, 0
      %p61 = por %p59, %p60
      %p62 = scmp.ne.s32.totalorder %s50, %s51
      %p63 = scmp.eq.s32.totalorder %s25, 7
      %p64 = por %p62, %p63
      %p66 = scmp.ne.s32.totalorder %s51, %s65
      %p67 = scmp.eq.s32.totalorder %s25, 0
      %p68 = por %p66, %p67
      %s70 = sadd.s32 %s69, 1
      %p73 = scmp.eq.s32.totalorder %s19, 7
      %p74 = scmp.ne.s32.totalorder %s69, %s71
      %p75 = scmp.eq.s32.totalorder %s19, 0
      %p76 = por %p74, %p75
      %p77 = scmp.ne.s32.totalorder %s69, %s71
      %p78 = scmp.eq.s32.totalorder %s24, 7
      %p79 = por %p77, %p78
      %p80 = scmp.ne.s32.totalorder %s71, %s72
      %p81 = scmp.eq.s32.totalorder %s24, 0
      %p82 = por %p80, %p81
      %p83 = scmp.ne.s32.totalorder %s71, %s72
      %p84 = scmp.eq.s32.totalorder %s25, 7
      %p85 = por %p83, %p84
      %p87 = scmp.ne.s32.totalorder %s72, %s86
      %p88 = scmp.eq.s32.totalorder %s25, 0
      %p89 = por %p87, %p88
      %s91 = sadd.s32 %s90, 1
      %p94 = scmp.eq.s32.totalorder %s19, 7
      %p95 = scmp.ne.s32.totalorder %s90, %s92
      %p96 = scmp.eq.s32.totalorder %s19, 0
      %p97 = por %p95, %p96
      %p98 = scmp.ne.s32.totalorder %s90, %s92
      %p99 = scmp.eq.s32.totalorder %s24, 7
      %p100 = por %p98, %p99
      %p101 = scmp.ne.s32.totalorder %s92, %s93
      %p102 = scmp.eq.s32.totalorder %s24, 0
      %p103 = por %p101, %p102
      %p104 = scmp.ne.s32.totalorder %s92, %s93
      %p105 = scmp.eq.s32.totalorder %s25, 7
      %p106 = por %p104, %p105
      %p108 = scmp.ne.s32.totalorder %s93, %s107
      %p109 = scmp.eq.s32.totalorder %s25, 0
      %p110 = por %p108, %p109
      %s112 = sadd.s32 %s111, 1
      %p115 = scmp.eq.s32.totalorder %s19, 7
      %p116 = scmp.ne.s32.totalorder %s111, %s113
      %p117 = scmp.eq.s32.totalorder %s19, 0
      %p118 = por %p116, %p117
      %p119 = scmp.ne.s32.totalorder %s111, %s113
      %p120 = scmp.eq.s32.totalorder %s24, 7
      %p121 = por %p119, %p120
      %p122 = scmp.ne.s32.totalorder %s113, %s114
      %p123 = scmp.eq.s32.totalorder %s24, 0
      %p124 = por %p122, %p123
      %p125 = scmp.ne.s32.totalorder %s113, %s114
      %p126 = scmp.eq.s32.totalorder %s25, 7
      %p127 = por %p125, %p126
      %p129 = scmp.ne.s32.totalorder %s114, %s128
      %p130 = scmp.eq.s32.totalorder %s25, 0
      %p131 = por %p129, %p130
      %s133 = sadd.s32 %s132, 1
      %p136 = scmp.eq.s32.totalorder %s19, 7
      %p137 = scmp.ne.s32.totalorder %s132, %s134
      %p138 = scmp.eq.s32.totalorder %s19, 0
      %p139 = por %p137, %p138
      %p140 = scmp.ne.s32.totalorder %s132, %s134
      %p141 = scmp.eq.s32.totalorder %s24, 7
      %p142 = por %p140, %p141
      %p143 = scmp.ne.s32.totalorder %s134, %s135
      %p144 = scmp.eq.s32.totalorder %s24, 0
      %p145 = por %p143, %p144
      %p146 = scmp.ne.s32.totalorder %s134, %s135
      %p147 = scmp.eq.s32.totalorder %s25, 7
      %p148 = por %p146, %p147
      %p150 = scmp.ne.s32.totalorder %s135, %s149
      %p151 = scmp.eq.s32.totalorder %s25, 0
      %p152 = por %p150, %p151
      %s154 = sadd.s32 %s153, 1
      %p157 = scmp.eq.s32.totalorder %s19, 7
      %p158 = scmp.ne.s32.totalorder %s153, %s155
      %p159 = scmp.eq.s32.totalorder %s19, 0
      %p160 = por %p158, %p159
      %p161 = scmp.ne.s32.totalorder %s153, %s155
      %p162 = scmp.eq.s32.totalorder %s24, 7
      %p163 = por %p161, %p162
      %p164 = scmp.ne.s32.totalorder %s155, %s156
      %p165 = scmp.eq.s32.totalorder %s24, 0
      %p166 = por %p164, %p165
      %p167 = scmp.ne.s32.totalorder %s155, %s156
      %p168 = scmp.eq.s32.totalorder %s25, 7
      %p169 = por %p167, %p168
      %p171 = scmp.ne.s32.totalorder %s156, %s170
      %p172 = scmp.eq.s32.totalorder %s25, 0
      %p173 = por %p171, %p172
      %s175 = sadd.s32 %s174, 1
      %p178 = scmp.eq.s32.totalorder %s19, 7
      %p179 = scmp.ne.s32.totalorder %s174, %s176
      %p180 = scmp.eq.s32.totalorder %s19, 0
      %p181 = por %p179, %p180
      %p182 = scmp.ne.s32.totalorder %s174, %s176
      %p183 = scmp.eq.s32.totalorder %s24, 7
      %p184 = por %p182, %p183
      %p185 = scmp.ne.s32.totalorder %s176, %s177
      %p186 = scmp.eq.s32.totalorder %s24, 0
      %p187 = por %p185, %p186
      %p188 = scmp.ne.s32.totalorder %s176, %s177
      %p189 = scmp.eq.s32.totalorder %s25, 7
      %p190 = por %p188, %p189
      %p192 = scmp.ne.s32.totalorder %s177, %s191
      %p193 = scmp.eq.s32.totalorder %s25, 0
      %p194 = por %p192, %p193
      %p195 = scmp.le.s32.totalorder 1, %s19
      %p196 = scmp.lt.s32.totalorder %s19, 9
      %p197 = pnand %p195, %p196
      %p198 = pneg %p197
      // Predicated region
      $region9: #{tpu_custom_call.1} parent=5 // pred_check
        _
      $region10: #{tpu_custom_call.1} parent=5 // pred_check_branch
        %200 = sbr.rel (%p197) target = $region12
      $region11: #{tpu_custom_call.1} parent=5 // pred_region
        %s201 = ssub.s32 %s19, 1
        // Predicated region
        $region13: #{tpu_custom_call.1} parent=11 // pred_check
          %p202 = pneg %p40
        $region14: #{tpu_custom_call.1} parent=11 // pred_check_branch
          %204 = sbr.rel (%p202) target = $region16
        $region15: #{tpu_custom_call.1} parent=11 // pred_region
          %206 = vsyncadd [#allocation6], 0
          %s208 = sshll.u32 %s0, 4
          %s209 = int_to_ptr.hbm [resolvable:$true] %s208
          %s210 = sshll.u32 [#allocation5], 4
          %s211 = int_to_ptr.vmem [resolvable:$true] %s210
          %213 = dma.hbm_to_vmem [thread:$0]  %s209, 128, %s211, [#allocation6]
        $region16: #{tpu_custom_call.1} parent=11 // pred_fallthru
          _
        // Predicated region
        $region17: #{tpu_custom_call.1} parent=11 // pred_check
          %p214 = pneg %p61
        $region18: #{tpu_custom_call.1} parent=11 // pred_check_branch
          %216 = sbr.rel (%p214) target = $region20
        $region19: #{tpu_custom_call.1} parent=11 // pred_region
          %218 = vsyncadd [#allocation9], 0
          %s220 = sshll.u32 %s1, 4
          %s221 = int_to_ptr.hbm [resolvable:$true] %s220
          %s222 = sshll.u32 [#allocation8], 4
          %s223 = int_to_ptr.vmem [resolvable:$true] %s222
          %225 = dma.hbm_to_vmem [thread:$0]  %s221, 16, %s223, [#allocation9]
        $region20: #{tpu_custom_call.1} parent=11 // pred_fallthru
          _
        // Predicated region
        $region21: #{tpu_custom_call.1} parent=11 // pred_check
          %p226 = pneg %p82
        $region22: #{tpu_custom_call.1} parent=11 // pred_check_branch
          %228 = sbr.rel (%p226) target = $region24
        $region23: #{tpu_custom_call.1} parent=11 // pred_region
          %230 = vsyncadd [#allocation9], 0
          %s232 = sshll.u32 %s2, 4
          %s233 = int_to_ptr.hbm [resolvable:$true] %s232
          %s234 = sshll.u32 [#allocation10], 4
          %s235 = int_to_ptr.vmem [resolvable:$true] %s234
          %237 = dma.hbm_to_vmem [thread:$0]  %s233, 16, %s235, [#allocation9]
        $region24: #{tpu_custom_call.1} parent=11 // pred_fallthru
          _
        // Predicated region
        $region25: #{tpu_custom_call.1} parent=11 // pred_check
          %p238 = pneg %p103
        $region26: #{tpu_custom_call.1} parent=11 // pred_check_branch
          %240 = sbr.rel (%p238) target = $region28
        $region27: #{tpu_custom_call.1} parent=11 // pred_region
          %242 = vsyncadd [#allocation12], 0
          %s243 = sshll.u32 %s3, 4
          %s244 = int_to_ptr.hbm [resolvable:$true] %s243
          %s245 = sshll.u32 [#allocation11], 4
          %s246 = int_to_ptr.vmem [resolvable:$true] %s245
          %251 = dma.hbm_to_vmem [thread:$0]  %s244, 2048, %s246, [#allocation12], 256, 256, 16
        $region28: #{tpu_custom_call.1} parent=11 // pred_fallthru
          _
        // Predicated region
        $region29: #{tpu_custom_call.1} parent=11 // pred_check
          %p252 = pneg %p124
        $region30: #{tpu_custom_call.1} parent=11 // pred_check_branch
          %254 = sbr.rel (%p252) target = $region32
        $region31: #{tpu_custom_call.1} parent=11 // pred_region
          %256 = vsyncadd [#allocation12], 0
          %s257 = sshll.u32 %s4, 4
          %s258 = int_to_ptr.hbm [resolvable:$true] %s257
          %s259 = sshll.u32 [#allocation13], 4
          %s260 = int_to_ptr.vmem [resolvable:$true] %s259
          %265 = dma.hbm_to_vmem [thread:$0]  %s258, 4096, %s260, [#allocation12], 256, 256, 16
        $region32: #{tpu_custom_call.1} parent=11 // pred_fallthru
          _
        // Predicated region
        $region33: #{tpu_custom_call.1} parent=11 // pred_check
          %p266 = pneg %p145
        $region34: #{tpu_custom_call.1} parent=11 // pred_check_branch
          %268 = sbr.rel (%p266) target = $region36
        $region35: #{tpu_custom_call.1} parent=11 // pred_region
          _
        $region36: #{tpu_custom_call.1} parent=11 // pred_fallthru
          _
      $region12: #{tpu_custom_call.1} parent=5 // pred_fallthru
        _
      %p269 = scmp.lt.s32.totalorder %s19, 8
      // Predicated region
      $region37: #{tpu_custom_call.1} parent=5 // pred_check
        %p270 = pneg %p269
      $region38: #{tpu_custom_call.1} parent=5 // pred_check_branch
        %272 = sbr.rel (%p270) target = $region40
      $region39: #{tpu_custom_call.1} parent=5 // pred_region
        _
      $region40: #{tpu_custom_call.1} parent=5 // pred_fallthru
        _
      %p273 = scmp.le.s32.totalorder 1, %s19
      %p274 = scmp.lt.s32.totalorder %s19, 9
      %p275 = pnand %p273, %p274
      %p276 = pneg %p275
      // Predicated region
      $region41: #{tpu_custom_call.1} parent=5 // pred_check
        _
      $region42: #{tpu_custom_call.1} parent=5 // pred_check_branch
        %278 = sbr.rel (%p275) target = $region44
      $region43: #{tpu_custom_call.1} parent=5 // pred_region
        %s279 = ssub.s32 %s19, 1
        // Predicated region
        $region45: #{tpu_custom_call.1} parent=43 // pred_check
          %p280 = pneg %p40
        $region46: #{tpu_custom_call.1} parent=43 // pred_check_branch
          %282 = sbr.rel (%p280) target = $region48
        $region47: #{tpu_custom_call.1} parent=43 // pred_region
          %284 = dma.done [#allocation6], 128
        $region48: #{tpu_custom_call.1} parent=43 // pred_fallthru
          _
        // Predicated region
        $region49: #{tpu_custom_call.1} parent=43 // pred_check
          %p285 = pneg %p61
        $region50: #{tpu_custom_call.1} parent=43 // pred_check_branch
          %287 = sbr.rel (%p285) target = $region52
        $region51: #{tpu_custom_call.1} parent=43 // pred_region
          %289 = dma.done [#allocation9], 16
        $region52: #{tpu_custom_call.1} parent=43 // pred_fallthru
          _
        // Predicated region
        $region53: #{tpu_custom_call.1} parent=43 // pred_check
          %p290 = pneg %p82
        $region54: #{tpu_custom_call.1} parent=43 // pred_check_branch
          %292 = sbr.rel (%p290) target = $region56
        $region55: #{tpu_custom_call.1} parent=43 // pred_region
          %294 = dma.done [#allocation9], 16
        $region56: #{tpu_custom_call.1} parent=43 // pred_fallthru
          _
        // Predicated region
        $region57: #{tpu_custom_call.1} parent=43 // pred_check
          %p295 = pneg %p103
        $region58: #{tpu_custom_call.1} parent=43 // pred_check_branch
          %297 = sbr.rel (%p295) target = $region60
        $region59: #{tpu_custom_call.1} parent=43 // pred_region
          %299 = dma.done [#allocation12], 2048
        $region60: #{tpu_custom_call.1} parent=43 // pred_fallthru
          _
        // Predicated region
        $region61: #{tpu_custom_call.1} parent=43 // pred_check
          %p300 = pneg %p124
        $region62: #{tpu_custom_call.1} parent=43 // pred_check_branch
          %302 = sbr.rel (%p300) target = $region64
        $region63: #{tpu_custom_call.1} parent=43 // pred_region
          %304 = dma.done [#allocation12], 4096
        $region64: #{tpu_custom_call.1} parent=43 // pred_fallthru
          _
        %p305 = pneg %p40
        %p306 = pneg %p37
        %p307 = pneg %p61
        %p308 = pneg %p58
        %p309 = pneg %p82
        %p310 = pneg %p79
        %p311 = pneg %p103
        %p312 = pneg %p100
        %p313 = pneg %p124
        %p314 = pneg %p121
        %p315 = pneg %p145
        %p316 = pneg %p142
        %p317 = pneg %p166
        %p318 = pneg %p163
        %p319 = pneg %p187
        %p320 = pneg %p184
        %p322 = scmp.eq.s32.totalorder %s24, 0
        // Predicated region
        $region65: #{tpu_custom_call.1} parent=43 // pred_check
          %p323 = pneg %p322
        $region66: #{tpu_custom_call.1} parent=43 // pred_check_branch
          %325 = sbr.rel (%p323) target = $region68
        $region67: #{tpu_custom_call.1} parent=43 // pred_region
          %v326 = vld [vmem:[#allocation8] sm:$0x1]
          %327 = vst [vmem:[#allocation3] sm:$0x1] %v326
          %v328 = vld [vmem:[#allocation10] sm:$0x1]
          %329 = vst [vmem:[#allocation4] sm:$0x1] %v328
          %v330 = vld [vmem:[#allocation5] sm:$0xff]
          %v331 = vpack.c.bf16 %v330, %v330
          %v332 = vld [vmem:[#allocation11] sm:$0xff]
          %v333 = vld [vmem:[#allocation11 + $0x8] sm:$0xff]
          %v334 = vld [vmem:[#allocation11 + $0x10] sm:$0xff]
          %v335 = vld [vmem:[#allocation11 + $0x18] sm:$0xff]
          %v336 = vld [vmem:[#allocation11 + $0x20] sm:$0xff]
          %v337 = vld [vmem:[#allocation11 + $0x28] sm:$0xff]
          %v338 = vld [vmem:[#allocation11 + $0x30] sm:$0xff]
          %v339 = vld [vmem:[#allocation11 + $0x38] sm:$0xff]
          %v340 = vld [vmem:[#allocation11 + $0x40] sm:$0xff]
          %v341 = vld [vmem:[#allocation11 + $0x48] sm:$0xff]
          %v342 = vld [vmem:[#allocation11 + $0x50] sm:$0xff]
          %v343 = vld [vmem:[#allocation11 + $0x58] sm:$0xff]
          %v344 = vld [vmem:[#allocation11 + $0x60] sm:$0xff]
          %v345 = vld [vmem:[#allocation11 + $0x68] sm:$0xff]
          %v346 = vld [vmem:[#allocation11 + $0x70] sm:$0xff]
          %v347 = vld [vmem:[#allocation11 + $0x78] sm:$0xff]
          %v348 = vld [vmem:[%s5] sm:$0xf]
          %v350 = vperm.slane %v348, 0
          %v351 = vperm.slane %v348, 1
          %v352 = vperm.slane %v348, 2
          %v353 = vperm.slane %v348, 3
          %v374 = vunpack.c.l.b16 %v332
          %v375 = vunpack.c.h.b16 %v332
          %v376 = vunpack.c.l.b16 %v333
          %v377 = vunpack.c.h.b16 %v333
          %v378 = vunpack.c.l.b16 %v334
          %v379 = vunpack.c.h.b16 %v334
          %v380 = vunpack.c.l.b16 %v335
          %v381 = vunpack.c.h.b16 %v335
          %v382 = vunpack.c.l.b16 %v336
          %v383 = vunpack.c.h.b16 %v336
          %v384 = vunpack.c.l.b16 %v337
          %v385 = vunpack.c.h.b16 %v337
          %v386 = vunpack.c.l.b16 %v338
          %v387 = vunpack.c.h.b16 %v338
          %v388 = vunpack.c.l.b16 %v339
          %v389 = vunpack.c.h.b16 %v339
          %v390 = vunpack.c.l.b16 %v340
          %v391 = vunpack.c.h.b16 %v340
          %v392 = vunpack.c.l.b16 %v341
          %v393 = vunpack.c.h.b16 %v341
          %v394 = vunpack.c.l.b16 %v342
          %v395 = vunpack.c.h.b16 %v342
          %v396 = vunpack.c.l.b16 %v343
          %v397 = vunpack.c.h.b16 %v343
          %v398 = vunpack.c.l.b16 %v344
          %v399 = vunpack.c.h.b16 %v344
          %v400 = vunpack.c.l.b16 %v345
          %v401 = vunpack.c.h.b16 %v345
          %v402 = vunpack.c.l.b16 %v346
          %v403 = vunpack.c.h.b16 %v346
          %v404 = vunpack.c.l.b16 %v347
          %v405 = vunpack.c.h.b16 %v347
          %v406 = vpack.c.b16 %v378, %v374
          %v407 = vpack.c.b16 %v379, %v375
          %v408 = vpack.c.b16 %v380, %v376
          %v409 = vpack.c.b16 %v381, %v377
          %v410 = vpack.c.b16 %v386, %v382
          %v411 = vpack.c.b16 %v387, %v383
          %v412 = vpack.c.b16 %v388, %v384
          %v413 = vpack.c.b16 %v389, %v385
          %v414 = vpack.c.b16 %v394, %v390
          %v415 = vpack.c.b16 %v395, %v391
          %v416 = vpack.c.b16 %v396, %v392
          %v417 = vpack.c.b16 %v397, %v393
          %v418 = vpack.c.b16 %v402, %v398
          %v419 = vpack.c.b16 %v403, %v399
          %v420 = vpack.c.b16 %v404, %v400
          %v421 = vpack.c.b16 %v405, %v401
          %vm438 = vcmask 523264
          %v440 = vsel %vm438, %v331, 0
          %442 = vmatpush.bf16.msra.mxu0 0
          %443 = vmatpush.bf16.msra.mxu0 0
          %444 = vmatpush.bf16.msra.mxu0 0
          %445 = vmatpush.bf16.msra.mxu0 0
          %446 = vmatpush.bf16.msra.mxu0 %v418
          %447 = vmatpush.bf16.msra.mxu0 %v414
          %448 = vmatpush.bf16.msra.mxu0 %v410
          %449 = vmatpush.bf16.msra.mxu0 %v406
          %450 = vmatmul.bf16.gmra.mxu0 %v440
          %v451 = vpop.f32.mrf.mxu0
          %v452 = vadd.f32 %v350, %v451
          %v453 = vpop.f32.mrf.mxu0
          %454 = vdwg.mxu0
          %455 = vmatpush.bf16.msra.mxu0 0
          %456 = vmatpush.bf16.msra.mxu0 0
          %457 = vmatpush.bf16.msra.mxu0 0
          %458 = vmatpush.bf16.msra.mxu0 0
          %459 = vmatpush.bf16.msra.mxu0 %v419
          %460 = vmatpush.bf16.msra.mxu0 %v415
          %461 = vmatpush.bf16.msra.mxu0 %v411
          %462 = vmatpush.bf16.msra.mxu0 %v407
          %463 = vmatmul.bf16.gmra.mxu0 %v440
          %v464 = vpop.f32.mrf.mxu0
          %v465 = vadd.f32 %v351, %v464
          %v466 = vpop.f32.mrf.mxu0
          %467 = vdwg.mxu0
          %468 = vmatpush.bf16.msra.mxu0 0
          %469 = vmatpush.bf16.msra.mxu0 0
          %470 = vmatpush.bf16.msra.mxu0 0
          %471 = vmatpush.bf16.msra.mxu0 0
          %472 = vmatpush.bf16.msra.mxu0 %v420
          %473 = vmatpush.bf16.msra.mxu0 %v416
          %474 = vmatpush.bf16.msra.mxu0 %v412
          %475 = vmatpush.bf16.msra.mxu0 %v408
          %476 = vmatmul.bf16.gmra.mxu0 %v440
          %v477 = vpop.f32.mrf.mxu0
          %v478 = vadd.f32 %v352, %v477
          %v479 = vpop.f32.mrf.mxu0
          %480 = vdwg.mxu0
          %481 = vmatpush.bf16.msra.mxu0 0
          %482 = vmatpush.bf16.msra.mxu0 0
          %483 = vmatpush.bf16.msra.mxu0 0
          %484 = vmatpush.bf16.msra.mxu0 0
          %485 = vmatpush.bf16.msra.mxu0 %v421
          %486 = vmatpush.bf16.msra.mxu0 %v417
          %487 = vmatpush.bf16.msra.mxu0 %v413
          %488 = vmatpush.bf16.msra.mxu0 %v409
          %489 = vmatmul.bf16.gmra.mxu0 %v440
          %v490 = vpop.f32.mrf.mxu0
          %v491 = vadd.f32 %v353, %v490
          %v492 = vpop.f32.mrf.mxu0
          %493 = vdwg.mxu0
          %494 = vst [vmem:[#allocation2] sm:$0xff] %v452
          %495 = vst [vmem:[#allocation2 + $0x8] sm:$0xff] %v465
          %496 = vst [vmem:[#allocation2 + $0x10] sm:$0xff] %v478
          %497 = vst [vmem:[#allocation2 + $0x18] sm:$0xff] %v491
        $region68: #{tpu_custom_call.1} parent=43 // pred_fallthru
          _
        %s498 = sshra.s32 %s24, 3
        %s499 = sand.u32 %s24, 7
        %s500 = sshra.s32 %s24, 3
        %s501 = sand.u32 %s24, 7
        %s502 = smul.u32 %s498, 4
        %s503 = smul.u32 %s502, 8
        %s504 = sadd.s32 %s503, %s501
        %s505 = scalar_lea.vmem [#allocation2], %s504
        %v506 = vld [vmem:[%s505] ss:$8 sm:$0xf]
        %v507 = vld [vmem:[#allocation3] sm:$0x1]
        %v508 = vpack.c.bf16 %v507, %v507
        %v509 = vld [vmem:[#allocation13] sm:$0xff]
        %v510 = vld [vmem:[#allocation13 + $0x8] sm:$0xff]
        %v511 = vld [vmem:[#allocation13 + $0x10] sm:$0xff]
        %v512 = vld [vmem:[#allocation13 + $0x18] sm:$0xff]
        %v513 = vld [vmem:[#allocation13 + $0x20] sm:$0xff]
        %v514 = vld [vmem:[#allocation13 + $0x28] sm:$0xff]
        %v515 = vld [vmem:[#allocation13 + $0x30] sm:$0xff]
        %v516 = vld [vmem:[#allocation13 + $0x38] sm:$0xff]
        %v517 = vld [vmem:[#allocation13 + $0x40] sm:$0xff]
        %v518 = vld [vmem:[#allocation13 + $0x48] sm:$0xff]
        %v519 = vld [vmem:[#allocation13 + $0x50] sm:$0xff]
        %v520 = vld [vmem:[#allocation13 + $0x58] sm:$0xff]
        %v521 = vld [vmem:[#allocation13 + $0x60] sm:$0xff]
        %v522 = vld [vmem:[#allocation13 + $0x68] sm:$0xff]
        %v523 = vld [vmem:[#allocation13 + $0x70] sm:$0xff]
        %v524 = vld [vmem:[#allocation13 + $0x78] sm:$0xff]
        %v525 = vld [vmem:[#allocation13 + $0x80] sm:$0xff]
        %v526 = vld [vmem:[#allocation13 + $0x88] sm:$0xff]
        %v527 = vld [vmem:[#allocation13 + $0x90] sm:$0xff]
        %v528 = vld [vmem:[#allocation13 + $0x98] sm:$0xff]
        %v529 = vld [vmem:[#allocation13 + $0xa0] sm:$0xff]
        %v530 = vld [vmem:[#allocation13 + $0xa8] sm:$0xff]
        %v531 = vld [vmem:[#allocation13 + $0xb0] sm:$0xff]
        %v532 = vld [vmem:[#allocation13 + $0xb8] sm:$0xff]
        %v533 = vld [vmem:[#allocation13 + $0xc0] sm:$0xff]
        %v534 = vld [vmem:[#allocation13 + $0xc8] sm:$0xff]
        %v535 = vld [vmem:[#allocation13 + $0xd0] sm:$0xff]
        %v536 = vld [vmem:[#allocation13 + $0xd8] sm:$0xff]
        %v537 = vld [vmem:[#allocation13 + $0xe0] sm:$0xff]
        %v538 = vld [vmem:[#allocation13 + $0xe8] sm:$0xff]
        %v539 = vld [vmem:[#allocation13 + $0xf0] sm:$0xff]
        %v540 = vld [vmem:[#allocation13 + $0xf8] sm:$0xff]
        %v573 = vunpack.c.l.b16 %v509
        %v574 = vunpack.c.h.b16 %v509
        %v575 = vunpack.c.l.b16 %v510
        %v576 = vunpack.c.h.b16 %v510
        %v577 = vunpack.c.l.b16 %v511
        %v578 = vunpack.c.h.b16 %v511
        %v579 = vunpack.c.l.b16 %v512
        %v580 = vunpack.c.h.b16 %v512
        %v581 = vunpack.c.l.b16 %v513
        %v582 = vunpack.c.h.b16 %v513
        %v583 = vunpack.c.l.b16 %v514
        %v584 = vunpack.c.h.b16 %v514
        %v585 = vunpack.c.l.b16 %v515
        %v586 = vunpack.c.h.b16 %v515
        %v587 = vunpack.c.l.b16 %v516
        %v588 = vunpack.c.h.b16 %v516
        %v589 = vunpack.c.l.b16 %v517
        %v590 = vunpack.c.h.b16 %v517
        %v591 = vunpack.c.l.b16 %v518
        %v592 = vunpack.c.h.b16 %v518
        %v593 = vunpack.c.l.b16 %v519
        %v594 = vunpack.c.h.b16 %v519
        %v595 = vunpack.c.l.b16 %v520
        %v596 = vunpack.c.h.b16 %v520
        %v597 = vunpack.c.l.b16 %v521
        %v598 = vunpack.c.h.b16 %v521
        %v599 = vunpack.c.l.b16 %v522
        %v600 = vunpack.c.h.b16 %v522
        %v601 = vunpack.c.l.b16 %v523
        %v602 = vunpack.c.h.b16 %v523
        %v603 = vunpack.c.l.b16 %v524
        %v604 = vunpack.c.h.b16 %v524
        %v605 = vunpack.c.l.b16 %v525
        %v606 = vunpack.c.h.b16 %v525
        %v607 = vunpack.c.l.b16 %v526
        %v608 = vunpack.c.h.b16 %v526
        %v609 = vunpack.c.l.b16 %v527
        %v610 = vunpack.c.h.b16 %v527
        %v611 = vunpack.c.l.b16 %v528
        %v612 = vunpack.c.h.b16 %v528
        %v613 = vunpack.c.l.b16 %v529
        %v614 = vunpack.c.h.b16 %v529
        %v615 = vunpack.c.l.b16 %v530
        %v616 = vunpack.c.h.b16 %v530
        %v617 = vunpack.c.l.b16 %v531
        %v618 = vunpack.c.h.b16 %v531
        %v619 = vunpack.c.l.b16 %v532
        %v620 = vunpack.c.h.b16 %v532
        %v621 = vunpack.c.l.b16 %v533
        %v622 = vunpack.c.h.b16 %v533
        %v623 = vunpack.c.l.b16 %v534
        %v624 = vunpack.c.h.b16 %v534
        %v625 = vunpack.c.l.b16 %v535
        %v626 = vunpack.c.h.b16 %v535
        %v627 = vunpack.c.l.b16 %v536
        %v628 = vunpack.c.h.b16 %v536
        %v629 = vunpack.c.l.b16 %v537
        %v630 = vunpack.c.h.b16 %v537
        %v631 = vunpack.c.l.b16 %v538
        %v632 = vunpack.c.h.b16 %v538
        %v633 = vunpack.c.l.b16 %v539
        %v634 = vunpack.c.h.b16 %v539
        %v635 = vunpack.c.l.b16 %v540
        %v636 = vunpack.c.h.b16 %v540
        %v637 = vpack.c.b16 %v577, %v573
        %v638 = vpack.c.b16 %v578, %v574
        %v639 = vpack.c.b16 %v579, %v575
        %v640 = vpack.c.b16 %v580, %v576
        %v641 = vpack.c.b16 %v585, %v581
        %v642 = vpack.c.b16 %v586, %v582
        %v643 = vpack.c.b16 %v587, %v583
        %v644 = vpack.c.b16 %v588, %v584
        %v645 = vpack.c.b16 %v593, %v589
        %v646 = vpack.c.b16 %v594, %v590
        %v647 = vpack.c.b16 %v595, %v591
        %v648 = vpack.c.b16 %v596, %v592
        %v649 = vpack.c.b16 %v601, %v597
        %v650 = vpack.c.b16 %v602, %v598
        %v651 = vpack.c.b16 %v603, %v599
        %v652 = vpack.c.b16 %v604, %v600
        %v653 = vpack.c.b16 %v609, %v605
        %v654 = vpack.c.b16 %v610, %v606
        %v655 = vpack.c.b16 %v611, %v607
        %v656 = vpack.c.b16 %v612, %v608
        %v657 = vpack.c.b16 %v617, %v613
        %v658 = vpack.c.b16 %v618, %v614
        %v659 = vpack.c.b16 %v619, %v615
        %v660 = vpack.c.b16 %v620, %v616
        %v661 = vpack.c.b16 %v625, %v621
        %v662 = vpack.c.b16 %v626, %v622
        %v663 = vpack.c.b16 %v627, %v623
        %v664 = vpack.c.b16 %v628, %v624
        %v665 = vpack.c.b16 %v633, %v629
        %v666 = vpack.c.b16 %v634, %v630
        %v667 = vpack.c.b16 %v635, %v631
        %v668 = vpack.c.b16 %v636, %v632
        %701 = vmatpush.bf16.msra.mxu0 %v665
        %702 = vmatpush.bf16.msra.mxu0 %v661
        %703 = vmatpush.bf16.msra.mxu0 %v657
        %704 = vmatpush.bf16.msra.mxu0 %v653
        %705 = vmatpush.bf16.msra.mxu0 %v649
        %706 = vmatpush.bf16.msra.mxu0 %v645
        %707 = vmatpush.bf16.msra.mxu0 %v641
        %708 = vmatpush.bf16.msra.mxu0 %v637
        %709 = vmatmul.bf16.gmra.mxu0 %v508
        %v710 = vpop.f32.mrf.mxu0
        %v711 = vadd.f32 0.0, %v710
        %v712 = vpop.f32.mrf.mxu0
        %713 = vdwg.mxu0
        %714 = vmatpush.bf16.msra.mxu0 %v666
        %715 = vmatpush.bf16.msra.mxu0 %v662
        %716 = vmatpush.bf16.msra.mxu0 %v658
        %717 = vmatpush.bf16.msra.mxu0 %v654
        %718 = vmatpush.bf16.msra.mxu0 %v650
        %719 = vmatpush.bf16.msra.mxu0 %v646
        %720 = vmatpush.bf16.msra.mxu0 %v642
        %721 = vmatpush.bf16.msra.mxu0 %v638
        %722 = vmatmul.bf16.gmra.mxu0 %v508
        %v723 = vpop.f32.mrf.mxu0
        %v724 = vadd.f32 0.0, %v723
        %v725 = vpop.f32.mrf.mxu0
        %726 = vdwg.mxu0
        %727 = vmatpush.bf16.msra.mxu0 %v667
        %728 = vmatpush.bf16.msra.mxu0 %v663
        %729 = vmatpush.bf16.msra.mxu0 %v659
        %730 = vmatpush.bf16.msra.mxu0 %v655
        %731 = vmatpush.bf16.msra.mxu0 %v651
        %732 = vmatpush.bf16.msra.mxu0 %v647
        %733 = vmatpush.bf16.msra.mxu0 %v643
        %734 = vmatpush.bf16.msra.mxu0 %v639
        %735 = vmatmul.bf16.gmra.mxu0 %v508
        %v736 = vpop.f32.mrf.mxu0
        %v737 = vadd.f32 0.0, %v736
        %v738 = vpop.f32.mrf.mxu0
        %739 = vdwg.mxu0
        %740 = vmatpush.bf16.msra.mxu0 %v668
        %741 = vmatpush.bf16.msra.mxu0 %v664
        %742 = vmatpush.bf16.msra.mxu0 %v660
        %743 = vmatpush.bf16.msra.mxu0 %v656
        %744 = vmatpush.bf16.msra.mxu0 %v652
        %745 = vmatpush.bf16.msra.mxu0 %v648
        %746 = vmatpush.bf16.msra.mxu0 %v644
        %747 = vmatpush.bf16.msra.mxu0 %v640
        %748 = vmatmul.bf16.gmra.mxu0 %v508
        %v749 = vpop.f32.mrf.mxu0
        %v750 = vadd.f32 0.0, %v749
        %v751 = vpop.f32.mrf.mxu0
        %752 = vdwg.mxu0
        %v757 = vrot.slane %v724, 7
        %v758 = vrot.slane %v737, 6
        %v759 = vrot.slane %v750, 5
        %vm760 = vcmask 1040384
        %v761 = vsel %vm760, %v711, %v757
        %vm762 = vcmask 1042434
        %v763 = vsel %vm762, %v758, %v759
        %vm764 = vcmask 1041408
        %v765 = vsel %vm764, %v761, %v763
        %v767 = vadd.f32 %v506, %v765
        %v768 = vxor.u32 %v767, 2147483648
        %v769 = vmul.f32 %v768, 1.442695
        %v770 = vpow.pop %v769
        %v771 = vadd.f32 %v770, 1.0
        %v772 = vrcp.pop %v771
        %v773 = vmul.f32 %v771, %v772
        %v774 = vsub.f32 1.0, %v773
        %v775 = vmul.f32 %v772, %v774
        %v776 = vadd.f32 %v772, %v775
        %vm777 = vweird.f32 %v771
        %vm778 = vweird.f32 %v772
        %vm779 = vmor %vm777, %vm778
        %v780 = vsel %vm779, %v772, %v776
        %v781 = vand.u32 2147483647, %v771
        %vm782 = vcmp.eq.f32.partialorder %v781, 8.507059e+37
        %v783 = vand.u32 %v771, 2147483648
        %v784 = vor.u32 1.1754944e-38, %v783
        %v785 = vsel %vm782, %v784, %v780
        %v786 = vmul.f32 1.0, %v785
        %v788 = vrot.slane %v767, 3
        %v790 = vtanh.pop %v788
        %v791 = vld [vmem:[#allocation4] sm:$0x1]
        %v792 = vmul.f32 %v786, %v791
        %v794 = vrot.slane %v786, 1
        %v796 = vmul.f32 %v794, %v790
        %v797 = vadd.f32 %v792, %v796
        %v798 = vtanh.pop %v797
        %v799 = vrot.slane %v786, 2
        %v801 = vmul.f32 %v799, %v798
        %802 = vst [vmem:[#allocation3] sm:$0x1] %v801
        %803 = vst [vmem:[#allocation4] sm:$0x1] %v797
        %s804 = scalar_lea.vmem [#allocation14], %s24
        %805 = vst [vmem:[%s804] sm:$0x1] %v801
        %s806 = scalar_lea.vmem [#allocation15], %s24
        %807 = vst [vmem:[%s806] sm:$0x1] %v797
        // Predicated region
        $region69: #{tpu_custom_call.1} parent=43 // pred_check
          %p808 = pneg %p163
        $region70: #{tpu_custom_call.1} parent=43 // pred_check_branch
          %810 = sbr.rel (%p808) target = $region72
        $region71: #{tpu_custom_call.1} parent=43 // pred_region
          %812 = vsyncadd [#allocation7], 0
          %s814 = sshll.u32 [#allocation14], 4
          %s815 = int_to_ptr.vmem [resolvable:$true] %s814
          %s816 = sshll.u32 %s6, 4
          %s817 = int_to_ptr.hbm [resolvable:$true] %s816
          %819 = dma.vmem_to_hbm [thread:$0]  %s815, 128, %s817, [#allocation7]
        $region72: #{tpu_custom_call.1} parent=43 // pred_fallthru
          _
        // Predicated region
        $region73: #{tpu_custom_call.1} parent=43 // pred_check
          %p820 = pneg %p184
        $region74: #{tpu_custom_call.1} parent=43 // pred_check_branch
          %822 = sbr.rel (%p820) target = $region76
        $region75: #{tpu_custom_call.1} parent=43 // pred_region
          %824 = vsyncadd [#allocation16], 0
          %s826 = sshll.u32 [#allocation15], 4
          %s827 = int_to_ptr.vmem [resolvable:$true] %s826
          %s828 = sshll.u32 %s7, 4
          %s829 = int_to_ptr.hbm [resolvable:$true] %s828
          %831 = dma.vmem_to_hbm [thread:$0]  %s827, 128, %s829, [#allocation16]
        $region76: #{tpu_custom_call.1} parent=43 // pred_fallthru
          _
        // Predicated region
        $region77: #{tpu_custom_call.1} parent=43 // pred_check
          %p832 = pneg %p163
        $region78: #{tpu_custom_call.1} parent=43 // pred_check_branch
          %834 = sbr.rel (%p832) target = $region80
        $region79: #{tpu_custom_call.1} parent=43 // pred_region
          %836 = dma.done [#allocation7], 128
        $region80: #{tpu_custom_call.1} parent=43 // pred_fallthru
          _
        // Predicated region
        $region81: #{tpu_custom_call.1} parent=43 // pred_check
          %p837 = pneg %p184
        $region82: #{tpu_custom_call.1} parent=43 // pred_check_branch
          %839 = sbr.rel (%p837) target = $region84
        $region83: #{tpu_custom_call.1} parent=43 // pred_region
          %841 = dma.done [#allocation16], 128
        $region84: #{tpu_custom_call.1} parent=43 // pred_fallthru
          _
      $region44: #{tpu_custom_call.1} parent=5 // pred_fallthru
        _
      %p842 = scmp.le.s32.totalorder 2, %s19
      // Predicated region
      $region85: #{tpu_custom_call.1} parent=5 // pred_check
        %p843 = pneg %p842
      $region86: #{tpu_custom_call.1} parent=5 // pred_check_branch
        %845 = sbr.rel (%p843) target = $region88
      $region87: #{tpu_custom_call.1} parent=5 // pred_region
        %s846 = ssub.s32 %s19, 2
      $region88: #{tpu_custom_call.1} parent=5 // pred_fallthru
        _
    $region6: #{tpu_custom_call.1} parent=1 // loop_footer
      %s23 = sadd.s32 1, %s19
    $region7: #{tpu_custom_call.1} parent=1 // loop_footer_branch
      %18 = sbr.rel target = $region3
    $region8: #{tpu_custom_call.1} parent=1 // loop_exit
      _
    %847 = vsyncpa [#allocation6], 1
    %s848 = scalar_lea.sflag [#allocation6], 1
    %849 = vsyncpa %s848, 1
    %850 = vsyncpa [#allocation9], 1
    %851 = vsyncpa [#allocation12], 1
    %852 = vsyncpa [#allocation7], 1
    %s853 = scalar_lea.sflag [#allocation7], 1
    %854 = vsyncpa %s853, 1
    %855 = vsyncpa [#allocation16], 1

</llo_original>
